<compile_context>
chip_gen: v7x
topology: tpu7x:2x2x1
jax: 0.10.0
libtpu: 0.0.40
codegen_flags: <defaults>
</compile_context>

<pallas_src>
import jax
import jax.numpy as jnp
from jax.experimental import pallas as pl
from jax.experimental.pallas import tpu as pltpu


# Per-block byte budget for one row tile.  With double-buffered input + output
# plus the (small, often resident) pe block, scoped VMEM use stays ~<= 24 MiB:
# safe on v5e/v6e (128 MiB physical) and v7x (64 MiB physical) while large
# enough to sit near the HBM roofline plateau.
_TARGET_TILE_BYTES = 4 * 1024 * 1024
_VMEM_LIMIT_BYTES = 48 * 1024 * 1024


def make_positional_encoding(max_seq_len: int, embedding_dim: int) -> jnp.ndarray:
    """Reproduces the PyTorch buffer `pe` exactly (float32, (max_seq_len, D))."""
    positions = jnp.arange(max_seq_len, dtype=jnp.float32)
    inv_freq = 1.0 / (10000.0 ** (2.0 * jnp.arange(embedding_dim // 2, dtype=jnp.float32)
                                  / embedding_dim))
    angles = jnp.outer(positions, inv_freq)                  # (max_seq_len, D//2)
    pe = jnp.zeros((max_seq_len, embedding_dim), jnp.float32)
    pe = pe.at[:, 0::2].set(jnp.sin(angles))
    pe = pe.at[:, 1::2].set(jnp.cos(angles))
    return pe


def _pos_enc_kernel(x_ref, pe_ref, o_ref):
    # Plain 2-D elementwise add on matching (tile_rows, C) blocks: no size-1
    # leading dim, no broadcast_in_dim in the hot loop; explicit cast guards
    # against mixed-precision promotion.
    o_ref[...] = (x_ref[...] + pe_ref[...]).astype(o_ref.dtype)


def _divisors(n: int):
    out = set()
    d = 1
    while d * d <= n:
        if n % d == 0:
            out.add(d)
            out.add(n // d)
        d += 1
    return sorted(out)


def _choose_tile_rows(num_rows: int, pe_rows: int, per_row_bytes: int,
                      target_bytes: int) -> int:
    """Row-tile size that divides num_rows, obeys the (8, lane) sublane rule,
    is compatible with the pe row-period, and fits the VMEM budget."""
    valid = []
    for t in _divisors(num_rows):
        if not (t % 8 == 0 or t == num_rows):                    # sublane rule
            continue
        if not (t % pe_rows == 0 or pe_rows % t == 0):           # pe mapping
            continue
        valid.append(t)
    # t == num_rows is always valid, so `valid` is never empty.
    fitting = [t for t in valid if t * per_row_bytes <= target_bytes]
    if not fitting:
        # TODO(synk): rows wider than the tile budget would need lane tiling too.
        return min(valid)
    best = max(fitting)
    if best == num_rows:
        # Prefer >= 2 grid steps (keeps both v7x TensorCores busy) when a
        # half-sized tile also fits.
        halved = [t for t in fitting if num_rows // t >= 2]
        if halved and max(halved) * 2 >= num_rows:
            return max(halved)
    return best


def _chunk_rows_for_period(pe_rows: int, per_row_bytes: int, target_bytes: int):
    """Row-chunk size for the long-sequence path: must divide the pe period and
    be a multiple of 8 (sublane rule on the flattened slab).  None if no such
    divisor exists (caller falls back to the generic path)."""
    cands = [t for t in _divisors(pe_rows) if t % 8 == 0]
    if not cands:
        return None
    fitting = [t for t in cands if t * per_row_bytes <= target_bytes]
    return max(fitting) if fitting else min(cands)


def positional_encoding_forward(x: jnp.ndarray, pe: jnp.ndarray, *,
                                target_tile_bytes: int = _TARGET_TILE_BYTES
                                ) -> jnp.ndarray:
    """x: (batch, seq_len, embedding_dim); pe: (max_seq_len, embedding_dim)."""
    batch, seq_len, embedding_dim = x.shape
    # Matches `self.pe[:seq_len, :]` (static seq_len); pre-cast so the in-kernel
    # add is one VPU op and pe DMA traffic matches x's dtype.
    pe_slice = pe[:seq_len, :].astype(x.dtype)
    itemsize = jnp.dtype(x.dtype).itemsize

    if embedding_dim >= 128:
        # Lane dim = D, rows = batch*seq_len; pe repeats every seq_len rows.
        num_rows, row_width, pe_rows = batch * seq_len, embedding_dim, seq_len
        pe2 = pe_slice
    else:
        # Narrow D: fold seq*D into the lane dim so stores are lane-dense.
        num_rows, row_width, pe_rows = batch, seq_len * embedding_dim, 1
        pe2 = pe_slice.reshape(1, seq_len * embedding_dim)

    x2 = x.reshape(num_rows, row_width)
    per_row_bytes = row_width * itemsize
    period_bytes = pe_rows * per_row_bytes

    tile_rows = None
    use_batch_reuse = False
    if pe_rows > 1 and period_bytes > target_tile_bytes:
        tile_rows = _chunk_rows_for_period(pe_rows, per_row_bytes, target_tile_bytes)
        use_batch_reuse = tile_rows is not None

    if use_batch_reuse:
        # Long-sequence path: grid = (seq_chunks, batch), batch innermost, so
        # the pe chunk's block index is constant across the inner batch loop
        # and the pipeline does not re-fetch it per batch element.
        n_chunks = pe_rows // tile_rows
        grid = (n_chunks, batch)
        x_spec = pl.BlockSpec((tile_rows, row_width),
                              lambda j, b: (b * n_chunks + j, 0))
        out_spec = pl.BlockSpec((tile_rows, row_width),
                                lambda j, b: (b * n_chunks + j, 0))
        pe_arr = pe2
        pe_spec = pl.BlockSpec((tile_rows, row_width), lambda j, b: (j, 0))
        dim_sem = ("parallel", "arbitrary")
    else:
        tile_rows = _choose_tile_rows(num_rows, pe_rows, per_row_bytes,
                                      target_tile_bytes)
        grid = (num_rows // tile_rows,)
        x_spec = pl.BlockSpec((tile_rows, row_width), lambda i: (i, 0))
        out_spec = pl.BlockSpec((tile_rows, row_width), lambda i: (i, 0))
        if tile_rows % pe_rows == 0:
            # Each row tile spans whole pe periods: pre-tile pe to one block
            # that stays resident (constant index_map -> DMA'd once).
            reps = tile_rows // pe_rows
            pe_arr = jnp.tile(pe2, (reps, 1)) if reps > 1 else pe2
            pe_spec = pl.BlockSpec((tile_rows, row_width), lambda i: (0, 0))
        else:
            # Rare fallback (pe period too big and seq_len has no multiple-of-8
            # divisor): walk pe blocks modulo the period.
            n_pe_blocks = pe_rows // tile_rows
            pe_arr = pe2
            pe_spec = pl.BlockSpec((tile_rows, row_width),
                                   lambda i: (i % n_pe_blocks, 0))
        dim_sem = ("parallel",)

    out2 = pl.pallas_call(
        _pos_enc_kernel,
        out_shape=jax.ShapeDtypeStruct((num_rows, row_width), x.dtype),
        grid_spec=pltpu.PrefetchScalarGridSpec(
            num_scalar_prefetch=0,
            grid=grid,
            in_specs=[x_spec, pe_spec],
            out_specs=out_spec,
        ),
        compiler_params=pltpu.CompilerParams(
            dimension_semantics=dim_sem,
            vmem_limit_bytes=_VMEM_LIMIT_BYTES,
        ),
    )(x2, pe_arr)

    return out2.reshape(batch, seq_len, embedding_dim)


if __name__ == "__main__":
    key = jax.random.PRNGKey(0)

    # (1) Small shape matching the module: (batch=2, seq=8, hidden=32); D < 128
    # exercises the folded (batch, seq*D) lane-dense path.
    batch, seq_len, embedding_dim = 2, 8, 32
    max_seq_len = 16
    x = jax.random.normal(key, (batch, seq_len, embedding_dim), dtype=jnp.float32)
    pe = make_positional_encoding(max_seq_len, embedding_dim)
    out = jax.block_until_ready(positional_encoding_forward(x, pe))
    ref = x + pe[:seq_len, :][None, :, :]
    assert out.shape == (batch, seq_len, embedding_dim)
    assert jnp.allclose(out, ref, atol=1e-6), "mismatch vs reference (D<128 path)"

    # (2) D >= 128: row-flattened path with resident pre-tiled pe.
    batch2, seq_len2, embedding_dim2 = 2, 16, 128
    x_b = jax.random.normal(jax.random.PRNGKey(1),
                            (batch2, seq_len2, embedding_dim2), dtype=jnp.float32)
    pe_b = make_positional_encoding(seq_len2, embedding_dim2)
    out_b = jax.block_until_ready(positional_encoding_forward(x_b, pe_b))
    ref_b = x_b + pe_b[:seq_len2, :][None, :, :]
    assert jnp.allclose(out_b, ref_b, atol=1e-6), "mismatch vs reference (D>=128 path)"

    # (3) Same data with a tiny tile budget to exercise the long-sequence
    # batch-reuse grid (pe chunk fetched once, reused across the batch).
    out_c = jax.block_until_ready(
        positional_encoding_forward(x_b, pe_b,
                                    target_tile_bytes=8 * embedding_dim2 * 4))
    assert jnp.allclose(out_c, ref_b, atol=1e-6), "mismatch vs reference (reuse path)"

    print("KERNEL_OK")
</pallas_src>

<mosaic_0001>
module attributes {stable_mosaic.version = 11 : i64} {
  func.func @_pos_enc_kernel(%arg0: i32, %arg1: memref<2x256xf32, #tpu.memory_space<vmem>>, %arg2: memref<2x256xf32, #tpu.memory_space<vmem>>, %arg3: memref<2x256xf32, #tpu.memory_space<vmem>>) attributes {dimension_semantics = [#tpu.dimension_semantics<parallel>], iteration_bounds = array<i64: 1>, scalar_prefetch = 0 : i64, scratch_operands = 0 : i64, tpu.core_type = #tpu.core_type<tc>, window_params = [{transform_indices = @transform_0, window_bounds = array<i64: 2, 256>}, {pipeline_mode = #tpu.pipeline_mode<synchronous>, transform_indices = @transform_1, window_bounds = array<i64: 2, 256>}, {transform_indices = @transform_2, window_bounds = array<i64: 2, 256>}]} {
    %c0 = arith.constant 0 : index
    %c0_0 = arith.constant 0 : index
    %0 = vector.load %arg1[%c0, %c0_0] : memref<2x256xf32, #tpu.memory_space<vmem>>, vector<2x256xf32>
    %c0_1 = arith.constant 0 : index
    %c0_2 = arith.constant 0 : index
    %1 = vector.load %arg2[%c0_1, %c0_2] : memref<2x256xf32, #tpu.memory_space<vmem>>, vector<2x256xf32>
    %2 = arith.addf %0, %1 : vector<2x256xf32>
    %c0_3 = arith.constant 0 : index
    %c0_4 = arith.constant 0 : index
    %3 = vector.load %arg3[%c0_3, %c0_4] : memref<2x256xf32, #tpu.memory_space<vmem>>, vector<2x256xf32>
    tpu.vector_store %arg3[%c0_3, %c0_4], %2 {strides = array<i32>} : memref<2x256xf32, #tpu.memory_space<vmem>>, vector<2x256xf32>,
    return
  }
  func.func @transform_0(%arg0: i32) -> (i32, i32) {
    %c0_i32 = arith.constant 0 : i32
    %c0_i32_0 = arith.constant 0 : i32
    return %arg0, %c0_i32 : i32, i32
  }
  func.func @transform_1(%arg0: i32) -> (i32, i32) {
    %c0_i32 = arith.constant 0 : i32
    %c0_i32_0 = arith.constant 0 : i32
    %c0_i32_1 = arith.constant 0 : i32
    return %c0_i32, %c0_i32_0 : i32, i32
  }
  func.func @transform_2(%arg0: i32) -> (i32, i32) {
    %c0_i32 = arith.constant 0 : i32
    %c0_i32_0 = arith.constant 0 : i32
    return %arg0, %c0_i32 : i32, i32
  }
}

</mosaic_0001>

<llo_original>
// kernel: tpu_custom_call.1
$region0: #{tpu_custom_call.1}
  #allocation0 [shape = 'u32[]', space=smem, size = 0x4, offset = 0x4, fixed_abs, tag = 'smem constant byte address 0x4 - core index']
  #allocation1 [shape = 'u32[144,128]{1,0:T(1,128)}', space=vmem, size = 0x12000, scoped, tag = 'internal scratch']
  %s0 = inlined_call_operand.hbm [shape: f32[2,256], index: 0, kind: input, shape index: {}]
  %s1 = inlined_call_operand.hbm [shape: f32[2,256], index: 1, kind: input, shape index: {}]
  %s2 = inlined_call_operand.hbm [shape: f32[2,256], index: 2, kind: output, shape index: {}]
  %s3 = sld [smem:[#allocation0]]
  $region26: #{tpu_custom_call.1} parent=0
    _
  %s5 = ssub.s32 1, %s3
  %s6 = scalar_select 0, %s5, %s3
  $region1: #{tpu_custom_call.1} parent=0
    #allocation2 [shape = 'u8[2048]{0}', space=vmem, size = 0x800, scoped, tag = 'input window, operand 0, single buffered']
    #allocation3 [shape = 's32[1]{0}', space=sflag, size = 0x4, scoped, tag = 'scoped memory for tpu_custom_call.1']
    #allocation4 [shape = 's32[1]{0}', space=sflag, size = 0x4, scoped, tag = 'scoped memory for tpu_custom_call.1']
    #allocation5 [shape = 'u8[2048]{0}', space=vmem, size = 0x800, scoped, tag = 'input window, operand 1, single buffered']
    #allocation6 [shape = 's32[1]{0}', space=sflag, size = 0x4, scoped, tag = 'scoped memory for tpu_custom_call.1']
    #allocation7 [shape = 'u8[2048]{0}', space=vmem, size = 0x800, scoped, tag = 'output window, operand 0, single buffered']
    %7 = vsyncpa [#allocation3], 0
    %8 = vsyncpa [#allocation6], 0
    %9 = vsyncpa [#allocation4], 0
    // Predicated region
    $region2: #{tpu_custom_call.1} parent=1 // pred_check
      _
    $region3: #{tpu_custom_call.1} parent=1 // pred_check_branch
      %11 = sbr.rel (0) target = $region5
    $region4: #{tpu_custom_call.1} parent=1 // pred_region
      %s13 = ssub.s32 64, 64
      %14 = vsyncadd [#allocation3], %s13
      %s16 = sshll.u32 [#allocation2], 4
      %s17 = int_to_ptr.vmem [resolvable:$true] %s16
      %19 = dma.hbm_to_vmem [thread:$0]  %s0, 64, %s17, [#allocation3]
    $region5: #{tpu_custom_call.1} parent=1 // pred_fallthru
      _
    // Predicated region
    $region6: #{tpu_custom_call.1} parent=1 // pred_check
      _
    $region7: #{tpu_custom_call.1} parent=1 // pred_check_branch
      %21 = sbr.rel (0) target = $region9
    $region8: #{tpu_custom_call.1} parent=1 // pred_region
      %s23 = ssub.s32 64, 64
      %24 = vsyncadd [#allocation6], %s23
      %s26 = sshll.u32 [#allocation5], 4
      %s27 = int_to_ptr.vmem [resolvable:$true] %s26
      %29 = dma.hbm_to_vmem [thread:$0]  %s1, 64, %s27, [#allocation6]
    $region9: #{tpu_custom_call.1} parent=1 // pred_fallthru
      _
    // Predicated region
    $region10: #{tpu_custom_call.1} parent=1 // pred_check
      _
    $region11: #{tpu_custom_call.1} parent=1 // pred_check_branch
      %31 = sbr.rel (0) target = $region13
    $region12: #{tpu_custom_call.1} parent=1 // pred_region
      %32 = dma.done [#allocation3], 64
    $region13: #{tpu_custom_call.1} parent=1 // pred_fallthru
      _
    // Predicated region
    $region14: #{tpu_custom_call.1} parent=1 // pred_check
      _
    $region15: #{tpu_custom_call.1} parent=1 // pred_check_branch
      %34 = sbr.rel (0) target = $region17
    $region16: #{tpu_custom_call.1} parent=1 // pred_region
      %35 = dma.done [#allocation6], 64
    $region17: #{tpu_custom_call.1} parent=1 // pred_fallthru
      _
    %v36 = vld [vmem:[#allocation2] sm:$0xf]
    %v37 = vld [vmem:[#allocation5] sm:$0xf]
    %v38 = vadd.f32 %v36, %v37
    %39 = vst [vmem:[#allocation7] sm:$0xf] %v38
    // Predicated region
    $region18: #{tpu_custom_call.1} parent=1 // pred_check
      _
    $region19: #{tpu_custom_call.1} parent=1 // pred_check_branch
      %41 = sbr.rel (0) target = $region21
    $region20: #{tpu_custom_call.1} parent=1 // pred_region
      %s43 = ssub.s32 64, 64
      %44 = vsyncadd [#allocation4], %s43
      %s46 = sshll.u32 [#allocation7], 4
      %s47 = int_to_ptr.vmem [resolvable:$true] %s46
      %49 = dma.vmem_to_hbm [thread:$0]  %s47, 64, %s2, [#allocation4]
    $region21: #{tpu_custom_call.1} parent=1 // pred_fallthru
      _
    // Predicated region
    $region22: #{tpu_custom_call.1} parent=1 // pred_check
      _
    $region23: #{tpu_custom_call.1} parent=1 // pred_check_branch
      %51 = sbr.rel (0) target = $region25
    $region24: #{tpu_custom_call.1} parent=1 // pred_region
      %52 = dma.done [#allocation4], 64
    $region25: #{tpu_custom_call.1} parent=1 // pred_fallthru
      _
    %53 = vsyncpa [#allocation3], 1
    %54 = vsyncpa [#allocation6], 1
    %55 = vsyncpa [#allocation4], 1

</llo_original>
